<compile_context>
chip_gen: v6e
topology: v6e:2x2x1
jax: 0.10.0
libtpu: 0.0.40
codegen_flags: <defaults>
</compile_context>

<pallas_src>
import functools

import jax
import jax.numpy as jnp
from jax.experimental import pallas as pl
from jax.experimental.pallas import tpu as pltpu


def _focal_loss_kernel(*refs, gamma: float, n_valid: int, tile_n: int,
                       use_alpha: bool, need_mask: bool):
    if use_alpha:
        xT_ref, t_ref, alpha_ref, out_ref = refs
    else:
        xT_ref, t_ref, out_ref = refs
        alpha_ref = None

    i = pl.program_id(0)

    x = xT_ref[...].astype(jnp.float32)      # (C, T) classes on sublanes
    t = t_ref[...]                           # (1, T) int32 class ids
    c, tn = x.shape

    # Numerically stable log-softmax pieces over the class (sublane) axis.
    m = jnp.max(x, axis=0, keepdims=True)                        # (1, T)
    z = x - m                                                    # (C, T)
    lse = jnp.log(jnp.sum(jnp.exp(z), axis=0, keepdims=True))    # (1, T)

    # gather(1, target) via select + sublane reduce; never build full logp.
    # Tiny (C, 1) class-index iota, broadcast inside the compare.
    cls = jax.lax.broadcasted_iota(jnp.int32, (c, 1), 0)         # (C, 1)
    sel = cls == t                                               # (C, T) bool
    z_t = jnp.sum(jnp.where(sel, z, 0.0), axis=0, keepdims=True)  # (1, T)
    logpt = z_t - lse                                            # (1, T)

    pt = jnp.exp(logpt)
    q = jnp.maximum(1.0 - pt, 0.0)

    # (1 - pt) ** gamma: repeated multiply for small integer gamma (avoids
    # pow's log/exp and the 0**gamma edge case).
    g_int = int(round(gamma))
    if abs(gamma - g_int) < 1e-12 and 0 <= g_int <= 8:
        if g_int == 0:
            focal = jnp.ones_like(q)
        else:
            focal = q
            for _ in range(g_int - 1):
                focal = focal * q
    else:
        focal = jnp.power(q, jnp.float32(gamma))

    if use_alpha:
        alpha = alpha_ref[...].astype(jnp.float32)               # (C, 1)
        a_t = jnp.sum(jnp.where(sel, alpha, 0.0), axis=0, keepdims=True)
        loss = -a_t * (focal * logpt)                            # (1, T)
    else:
        # alpha=None path of the module: alpha == ones -> a_t == 1.
        loss = -(focal * logpt)                                  # (1, T)

    if need_mask:
        last = pl.num_programs(0) - 1

        @pl.when(i == last)
        def _ragged_tail():
            # Only the final (ragged) tile pays for the iota/compare/select.
            lane = jax.lax.broadcasted_iota(jnp.int32, (1, tn), 1)
            valid = (i * tile_n + lane) < n_valid
            out_ref[...] = jnp.sum(jnp.where(valid, loss, 0.0),
                                   axis=1, keepdims=True)

        @pl.when(i != last)
        def _full_tile():
            out_ref[...] = jnp.sum(loss, axis=1, keepdims=True)
    else:
        out_ref[...] = jnp.sum(loss, axis=1, keepdims=True)


def focal_loss(logits, target, alpha_vec=None, gamma=2.0, reduction="mean",
               class_major=False):
    """FocalLoss forward.

    logits: (N, C) float (or (C, N) if class_major=True), target: (N,) int,
    alpha_vec: None (unit alpha, module's alpha=None path) or (C,) weights.
    """
    if class_major:
        x_t = logits
        c, n = x_t.shape
    else:
        n, c = logits.shape
        # TODO(synk): extra HBM pass; fuse into the producer and use class_major.
        x_t = jnp.transpose(logits, (1, 0))                  # (C, N)

    t2d = target.reshape(1, n).astype(jnp.int32)             # (1, N)
    use_alpha = alpha_vec is not None

    # --- per-generation tile sizing -------------------------------------
    itemsize = jnp.dtype(x_t.dtype).itemsize
    try:
        info = pltpu.get_tpu_info()
        vmem_cap = int(getattr(info, "vmem_capacity_bytes", 64 * 1024 * 1024))
    except Exception:
        vmem_cap = 64 * 1024 * 1024

    # VMEM bytes per lane column: double-buffered logits + target blocks plus
    # ~6 live (C, T) f32 intermediates and a handful of (1, T) vectors.
    per_lane = 2 * c * itemsize + 2 * 4 + 6 * c * 4 + 6 * 4
    budget = min(vmem_cap // 2, 48 * 1024 * 1024)
    t_cap = max(128, (budget // per_lane) // 128 * 128)
    t_cap = min(t_cap, 128 * 1024)

    if n > t_cap:
        tile_n = t_cap                    # multiple of 128; last block may be ragged
    else:
        tile_n = n                        # single full-array block, no padding/mask

    grid_n = pl.cdiv(n, tile_n)
    need_mask = (n % tile_n) != 0

    vmem_limit = max(32 * 1024 * 1024,
                     min(vmem_cap * 3 // 4, 100 * 1024 * 1024))

    kernel = functools.partial(
        _focal_loss_kernel, gamma=float(gamma), n_valid=n, tile_n=tile_n,
        use_alpha=use_alpha, need_mask=need_mask)

    in_specs = [
        pl.BlockSpec((c, tile_n), lambda i: (0, i)),     # logits^T tile
        pl.BlockSpec((1, tile_n), lambda i: (0, i)),     # target tile
    ]
    operands = [x_t, t2d]
    if use_alpha:
        in_specs.append(pl.BlockSpec((c, 1), lambda i: (0, 0)))  # resident alpha
        operands.append(jnp.asarray(alpha_vec, jnp.float32).reshape(c, 1))

    partial_sums = pl.pallas_call(
        kernel,
        out_shape=jax.ShapeDtypeStruct((1, grid_n), jnp.float32),
        grid_spec=pltpu.PrefetchScalarGridSpec(
            num_scalar_prefetch=0,
            grid=(grid_n,),
            in_specs=in_specs,
            out_specs=pl.BlockSpec((1, 1), lambda i: (0, i)),
        ),
        compiler_params=pltpu.CompilerParams(
            dimension_semantics=("parallel",),   # per-tile partial sums -> 2 TCs on v7x
            vmem_limit_bytes=vmem_limit,
        ),
    )(*operands)

    total = jnp.sum(partial_sums)
    if reduction == "mean":
        return total / jnp.float32(n)
    if reduction == "sum":
        return total
    # TODO(synk): reduction='none' needs a per-element (N,) output block.
    raise ValueError(f"{reduction} is not a supported reduction here")


def focal_loss_ref(logits, target, alpha_vec, gamma=2.0):
    """Pure-JAX reference mirroring the PyTorch forward, for validation."""
    logp = jax.nn.log_softmax(logits.astype(jnp.float32), axis=1)
    logpt = jnp.take_along_axis(logp, target.reshape(-1, 1), axis=1).reshape(-1)
    pt = jnp.exp(logpt)
    a_t = alpha_vec[target]
    loss = -1.0 * a_t * jnp.power(1.0 - pt, gamma) * logpt
    return loss.mean()


if __name__ == "__main__":
    # Module __init__ defaults: alpha=None -> ones(num_class), gamma=2,
    # reduction='mean'.  Small shapes: num_class=4, batch N=8.
    num_class = 4
    n = 8
    gamma = 2.0

    key = jax.random.PRNGKey(0)
    k1, k2 = jax.random.split(key)
    logits = jax.random.normal(k1, (n, num_class), dtype=jnp.float32)
    target = jax.random.randint(k2, (n,), 0, num_class, dtype=jnp.int32)

    # alpha=None path (module: alpha -> ones(num_class)).
    out = jax.block_until_ready(focal_loss(logits, target, None, gamma=gamma))
    ref = focal_loss_ref(logits, target, jnp.ones((num_class,), jnp.float32), gamma)
    assert jnp.allclose(out, ref, rtol=1e-5, atol=1e-6), (out, ref)

    # explicit alpha list path (module normalizes alpha / alpha.sum()).
    alpha = jnp.asarray([1.0, 2.0, 3.0, 4.0], jnp.float32)
    alpha = alpha / alpha.sum()
    out2 = jax.block_until_ready(focal_loss(logits, target, alpha, gamma=gamma))
    ref2 = focal_loss_ref(logits, target, alpha, gamma)
    assert jnp.allclose(out2, ref2, rtol=1e-5, atol=1e-6), (out2, ref2)

    print("KERNEL_OK")
</pallas_src>

<mosaic_0001>
module attributes {stable_mosaic.version = 11 : i64} {
  func.func @_focal_loss_kernel(%arg0: i32, %arg1: memref<4x8xf32, #tpu.memory_space<vmem>>, %arg2: memref<1x8xi32, #tpu.memory_space<vmem>>, %arg3: memref<1x1xf32, #tpu.memory_space<vmem>>) attributes {dimension_semantics = [#tpu.dimension_semantics<parallel>], iteration_bounds = array<i64: 1>, scalar_prefetch = 0 : i64, scratch_operands = 0 : i64, tpu.core_type = #tpu.core_type<tc>, window_params = [{transform_indices = @transform_0, window_bounds = array<i64: 4, 8>}, {transform_indices = @transform_1, window_bounds = array<i64: 1, 8>}, {transform_indices = @transform_2, window_bounds = array<i64: 1, 1>}]} {
    %c0 = arith.constant 0 : index
    %c0_0 = arith.constant 0 : index
    %0 = vector.load %arg1[%c0, %c0_0] : memref<4x8xf32, #tpu.memory_space<vmem>>, vector<4x8xf32>
    %c0_1 = arith.constant 0 : index
    %c0_2 = arith.constant 0 : index
    %1 = vector.load %arg2[%c0_1, %c0_2] : memref<1x8xi32, #tpu.memory_space<vmem>>, vector<1x8xi32>
    %cst = arith.constant dense<0xFF800000> : vector<8xf32>
    %2 = vector.multi_reduction <maximumf>, %0, %cst [0] : vector<4x8xf32> to vector<8xf32>
    %3 = vector.shape_cast %2 : vector<8xf32> to vector<1x8xf32>
    %4 = vector.broadcast %3 : vector<1x8xf32> to vector<4x8xf32>
    %5 = arith.subf %0, %4 : vector<4x8xf32>
    %6 = math.exp %5 : vector<4x8xf32>
    %cst_3 = arith.constant dense<0.000000e+00> : vector<8xf32>
    %7 = vector.multi_reduction <add>, %6, %cst_3 [0] : vector<4x8xf32> to vector<8xf32>
    %8 = vector.shape_cast %7 : vector<8xf32> to vector<1x8xf32>
    %9 = math.log %8 : vector<1x8xf32>
    %10 = tpu.iota {dimensions = array<i32: 0>} : vector<4x1xi32>
    %11 = vector.broadcast %10 : vector<4x1xi32> to vector<4x8xi32>
    %12 = vector.broadcast %1 : vector<1x8xi32> to vector<4x8xi32>
    %13 = arith.cmpi eq, %11, %12 : vector<4x8xi32>
    %cst_4 = arith.constant 0.000000e+00 : f32
    %14 = vector.broadcast %cst_4 : f32 to vector<4x8xf32>
    %15 = arith.select %13, %5, %14 : vector<4x8xi1>, vector<4x8xf32>
    %cst_5 = arith.constant dense<0.000000e+00> : vector<8xf32>
    %16 = vector.multi_reduction <add>, %15, %cst_5 [0] : vector<4x8xf32> to vector<8xf32>
    %17 = vector.shape_cast %16 : vector<8xf32> to vector<1x8xf32>
    %18 = arith.subf %17, %9 : vector<1x8xf32>
    %19 = math.exp %18 : vector<1x8xf32>
    %cst_6 = arith.constant 1.000000e+00 : f32
    %20 = vector.broadcast %cst_6 : f32 to vector<1x8xf32>
    %21 = arith.subf %20, %19 : vector<1x8xf32>
    %cst_7 = arith.constant 0.000000e+00 : f32
    %22 = vector.broadcast %cst_7 : f32 to vector<1x8xf32>
    %23 = arith.maximumf %21, %22 : vector<1x8xf32>
    %24 = arith.mulf %23, %23 : vector<1x8xf32>
    %25 = arith.mulf %24, %18 : vector<1x8xf32>
    %cst_8 = arith.constant 0.000000e+00 : f32
    %26 = vector.broadcast %cst_8 : f32 to vector<1x8xf32>
    %27 = arith.subf %26, %25 : vector<1x8xf32>
    %cst_9 = arith.constant dense<0.000000e+00> : vector<1xf32>
    %28 = vector.multi_reduction <add>, %27, %cst_9 [1] : vector<1x8xf32> to vector<1xf32>
    %29 = vector.shape_cast %28 : vector<1xf32> to vector<1x1xf32>
    %c0_10 = arith.constant 0 : index
    %c0_11 = arith.constant 0 : index
    %30 = vector.load %arg3[%c0_10, %c0_11] : memref<1x1xf32, #tpu.memory_space<vmem>>, vector<1x1xf32>
    tpu.vector_store %arg3[%c0_10, %c0_11], %29 {strides = array<i32>} : memref<1x1xf32, #tpu.memory_space<vmem>>, vector<1x1xf32>,
    return
  }
  func.func @transform_0(%arg0: i32) -> (i32, i32) {
    %c0_i32 = arith.constant 0 : i32
    %c0_i32_0 = arith.constant 0 : i32
    return %c0_i32, %arg0 : i32, i32
  }
  func.func @transform_1(%arg0: i32) -> (i32, i32) {
    %c0_i32 = arith.constant 0 : i32
    %c0_i32_0 = arith.constant 0 : i32
    return %c0_i32, %arg0 : i32, i32
  }
  func.func @transform_2(%arg0: i32) -> (i32, i32) {
    %c0_i32 = arith.constant 0 : i32
    %c0_i32_0 = arith.constant 0 : i32
    return %c0_i32, %arg0 : i32, i32
  }
}

</mosaic_0001>

<llo_original>
// kernel: tpu_custom_call.1
$region0: #{tpu_custom_call.1}
  #allocation0 [shape = 'u32[]', space=smem, size = 0x4, offset = 0x4, fixed_abs, tag = 'smem constant byte address 0x4 - core index']
  #allocation1 [shape = 'u32[144,128]{1,0:T(1,128)}', space=vmem, size = 0x12000, scoped, tag = 'internal scratch']
  %s0 = inlined_call_operand.hbm [shape: f32[4,8], index: 0, kind: input, shape index: {}]
  %s1 = inlined_call_operand.vmem [shape: s32[1,8], index: 1, kind: input, shape index: {}]
  %s2 = inlined_call_operand.hbm [shape: f32[1,1], index: 2, kind: output, shape index: {}]
  %s3 = sld [smem:[#allocation0]]
  $region22: #{tpu_custom_call.1} parent=0
    _
  %s5 = ssub.s32 1, %s3
  %s6 = scalar_select 0, %s5, %s3
  $region1: #{tpu_custom_call.1} parent=0
    #allocation2 [shape = 'u8[2048]{0}', space=vmem, size = 0x800, scoped, tag = 'input window, operand 0, single buffered']
    #allocation3 [shape = 's32[1]{0}', space=sflag, size = 0x4, scoped, tag = 'scoped memory for tpu_custom_call.1']
    #allocation4 [shape = 's32[1]{0}', space=sflag, size = 0x4, scoped, tag = 'scoped memory for tpu_custom_call.1']
    #allocation5 [shape = 'u8[512]{0}', space=vmem, size = 0x400, scoped, tag = 'output window, operand 0, single buffered']
    %7 = vsyncpa [#allocation3], 0
    %8 = vsyncpa [#allocation4], 0
    // Predicated region
    $region2: #{tpu_custom_call.1} parent=1 // pred_check
      _
    $region3: #{tpu_custom_call.1} parent=1 // pred_check_branch
      %10 = sbr.rel (0) target = $region5
    $region4: #{tpu_custom_call.1} parent=1 // pred_region
      %s12 = ssub.s32 64, 64
      %13 = vsyncadd [#allocation3], %s12
      %s15 = sshll.u32 [#allocation2], 4
      %s16 = int_to_ptr.vmem [resolvable:$true] %s15
      %18 = dma.hbm_to_vmem [thread:$0]  %s0, 64, %s16, [#allocation3]
    $region5: #{tpu_custom_call.1} parent=1 // pred_fallthru
      _
    // Predicated region
    $region6: #{tpu_custom_call.1} parent=1 // pred_check
      _
    $region7: #{tpu_custom_call.1} parent=1 // pred_check_branch
      %20 = sbr.rel (0) target = $region9
    $region8: #{tpu_custom_call.1} parent=1 // pred_region
      _
    $region9: #{tpu_custom_call.1} parent=1 // pred_fallthru
      _
    // Predicated region
    $region10: #{tpu_custom_call.1} parent=1 // pred_check
      _
    $region11: #{tpu_custom_call.1} parent=1 // pred_check_branch
      %22 = sbr.rel (0) target = $region13
    $region12: #{tpu_custom_call.1} parent=1 // pred_region
      %23 = dma.done [#allocation3], 64
    $region13: #{tpu_custom_call.1} parent=1 // pred_fallthru
      _
    %v24 = vld [vmem:[#allocation2] sm:$0xf]
    %v25 = vld [vmem:[%s1] sm:$0x1]
    %vm26 = vcmask 60416
    %v27 = vsel %vm26, %v24, -inf
    %v28 = vrot.slane %v27, 4
    %v29 = vmax.f32 %v27, %v28
    %v30 = vrot.slane %v29, 2
    %v31 = vmax.f32 %v29, %v30
    %v32 = vrot.slane %v31, 1
    %v33 = vmax.f32 %v31, %v32
    %v34 = vsub.f32 %v24, %v33
    %v35 = vmul.f32 %v34, 1.442695
    %v36 = vpow.pop %v35
    %v37 = vsel %vm26, %v36, 0.0
    %v38 = vrot.slane %v37, 4
    %v39 = vadd.f32 %v37, %v38
    %v40 = vrot.slane %v39, 2
    %v41 = vadd.f32 %v39, %v40
    %v42 = vrot.slane %v41, 1
    %v43 = vadd.f32 %v41, %v42
    %v44 = vlog2.pop %v43
    %v45 = vmul.f32 %v44, 0.6931472
    %v46 = vlaneseq
    %v47 = vshrl.u32 %v46, 7
    %v48 = vlaneseq
    %v49 = vshrl.u32 %v48, 7
    %v50 = vsub.s32 0, %v49
    %v51 = vrot.slane %v25, %v50
    %vm52 = vcmp.eq.s32.totalorder %v47, %v51
    %v53 = vsel %vm52, %v34, 0.0
    %v54 = vsel %vm26, %v53, 0.0
    %v55 = vrot.slane %v54, 4
    %v56 = vadd.f32 %v54, %v55
    %v57 = vrot.slane %v56, 2
    %v58 = vadd.f32 %v56, %v57
    %v59 = vrot.slane %v58, 1
    %v60 = vadd.f32 %v58, %v59
    %v61 = vsub.f32 %v60, %v45
    %v62 = vmul.f32 %v61, 1.442695
    %v63 = vpow.pop %v62
    %v64 = vsub.f32 1.0, %v63
    %v65 = vmax.f32 %v64, 0.0
    %v66 = vmul.f32 %v65, %v65
    %v67 = vmul.f32 %v66, %v61
    %v68 = vsub.f32 0.0, %v67
    %vm69 = vcmask 64512
    %v70 = vsel %vm69, %v68, 0.0
    %71 = vadd.xlane.f32.xlu0 %v70
    %v72 = vpop.xlane.xlu0 %71
    %vm73 = vcmask 0
    %74 = vst.msk [vmem:[#allocation5] sm:$0x1] %vm73, %v72
    // Predicated region
    $region14: #{tpu_custom_call.1} parent=1 // pred_check
      _
    $region15: #{tpu_custom_call.1} parent=1 // pred_check_branch
      %76 = sbr.rel (0) target = $region17
    $region16: #{tpu_custom_call.1} parent=1 // pred_region
      %s78 = ssub.s32 16, 16
      %79 = vsyncadd [#allocation4], %s78
      %s81 = sshll.u32 [#allocation5], 4
      %s82 = int_to_ptr.vmem [resolvable:$true] %s81
      %84 = dma.vmem_to_hbm [thread:$0]  %s82, 16, %s2, [#allocation4]
    $region17: #{tpu_custom_call.1} parent=1 // pred_fallthru
      _
    // Predicated region
    $region18: #{tpu_custom_call.1} parent=1 // pred_check
      _
    $region19: #{tpu_custom_call.1} parent=1 // pred_check_branch
      %86 = sbr.rel (0) target = $region21
    $region20: #{tpu_custom_call.1} parent=1 // pred_region
      %87 = dma.done [#allocation4], 16
    $region21: #{tpu_custom_call.1} parent=1 // pred_fallthru
      _
    %88 = vsyncpa [#allocation3], 1
    %89 = vsyncpa [#allocation4], 1

</llo_original>
